<compile_context>
chip_gen: v7x
topology: tpu7x:2x2x1
jax: 0.10.0
libtpu: 0.0.40
codegen_flags: <defaults>
</compile_context>

<pallas_src>
import jax
import jax.numpy as jnp
from jax.experimental import pallas as pl
from jax.experimental.pallas import tpu as pltpu

# ---------------- model dims ----------------
N, C_IN, H, W = 2, 4, 16, 16
C_INT = 32                      # base_network.out_channels
C_OUT = 3                       # Cerberus out_channels
C_HID = (C_OUT + C_INT) // 2    # default projection_layers = [(out+inter)//2]
HEAD_PAD = 8                    # rows per head in the packed W2 (sublane aligned)
# Clip buffers baked in as compile-time constants (they are registered buffers
# in the module).  If they must vary at runtime, pass them as SMEM scalars.
CLIP_LOW = -2.0
CLIP_HIGH = 2.0


def _softplus(x):
    # numerically stable softplus (matches F.softplus); exp/log1p go to the EUP.
    return jnp.maximum(x, 0.0) + jnp.log1p(jnp.exp(-jnp.abs(x)))


# ---------------- kernel ----------------
def cerberus_kernel(x_ref, win_ref, w1f_ref, w2_ref, out_ref):
    # x: (C_IN+1, N*HW) -- channels on sublanes, batch*pixels on lanes,
    #    last row is the constant-1 bias row.
    x = x_ref[...]

    # Fused matmul #1: base 1x1 conv, the three heads' skip-connection
    # contributions, their b1 biases (via the ones row of x), and a constant-1
    # "generator" row (row C_INT+3*C_HID) used to fold b2 into matmul #3.
    y = jnp.dot(win_ref[...], x, preferred_element_type=jnp.float32)   # (84, 512)
    feat = jnp.maximum(y[:C_INT, :], 0.0)          # base features, (C_INT, 512)
    skip = y[C_INT:, :]                            # (3*C_HID + 1, 512), last row == 1

    # Fused matmul #2: first layer (feature part) of all three heads; the last
    # (zero) W1f row keeps the generator row at relu(0 + 1) == 1.
    h = jnp.maximum(
        jnp.dot(w1f_ref[...], feat, preferred_element_type=jnp.float32) + skip,
        0.0)                                       # (3*C_HID + 1, 512)

    # Fused matmul #3: block-diagonal second layer of all three heads with b2
    # folded in as the last column (multiplying the constant-1 row of h).
    z = jnp.dot(w2_ref[...], h, preferred_element_type=jnp.float32)    # (24, 512)
    raw_lo = z[0:C_OUT, :]
    median = z[HEAD_PAD:HEAD_PAD + C_OUT, :]
    raw_hi = z[2 * HEAD_PAD:2 * HEAD_PAD + C_OUT, :]

    lower = median - _softplus(raw_lo)
    upper = median + _softplus(raw_hi)

    clip = lambda a: jnp.minimum(jnp.maximum(a, CLIP_LOW), CLIP_HIGH)
    # single packed, lane-dense store: rows = [lower | median | upper]
    out_ref[...] = jnp.concatenate(
        [clip(lower), clip(median), clip(upper)], axis=0)              # (9, 512)


# ---------------- weight packing (done once, outside the hot path) ----------------
def pack_params(params):
    # Fused input-side weight (transposed, kernel computes W^T @ X):
    #   rows    = [ base conv (C_INT) | skip parts of 3 heads (3*C_HID) | 1-gen row ]
    #   columns = [ input channels (C_IN) | bias column ]
    w1o_all = jnp.concatenate(
        [params["w1o_l"], params["w1o_m"], params["w1o_u"]], axis=1)    # (C_IN, 3*C_HID)
    b1_all = jnp.concatenate(
        [params["b1_l"], params["b1_m"], params["b1_u"]], axis=1)       # (1, 3*C_HID)

    win_t = jnp.concatenate([params["wb"], w1o_all], axis=1).T          # (83, C_IN)
    bin_c = jnp.concatenate([params["bb"], b1_all], axis=1).T           # (83, 1)
    win_aug = jnp.concatenate([win_t, bin_c], axis=1)                   # (83, C_IN+1)
    one_row = jnp.zeros((1, C_IN + 1), jnp.float32).at[0, C_IN].set(1.0)
    win_aug = jnp.concatenate([win_aug, one_row], axis=0)               # (84, C_IN+1)

    # Feature part of the heads' first layer + zero row for the 1-gen channel.
    w1f_t = jnp.concatenate(
        [params["w1f_l"], params["w1f_m"], params["w1f_u"]], axis=1).T  # (3*C_HID, C_INT)
    w1f_t = jnp.concatenate(
        [w1f_t, jnp.zeros((1, C_INT), jnp.float32)], axis=0)            # (3*C_HID+1, C_INT)

    # Block-diagonal second layer (transposed), rows padded to HEAD_PAD per
    # head for sublane-aligned output slices; last column = b2 (folded bias).
    w2_t = jnp.zeros((3 * HEAD_PAD, 3 * C_HID + 1), jnp.float32)
    for hix, suf in enumerate(("l", "m", "u")):
        r = hix * HEAD_PAD
        c = hix * C_HID
        w2_t = w2_t.at[r:r + C_OUT, c:c + C_HID].set(params["w2_" + suf].T)
        w2_t = w2_t.at[r:r + C_OUT, 3 * C_HID].set(params["b2_" + suf][0])
    return win_aug, w1f_t, w2_t


# ---------------- wrapper (jitted; packed weights are plain args) ----------------
@jax.jit
def cerberus_forward(x_nchw, win_aug, w1f_t, w2_t):
    n, c, hgt, wdt = x_nchw.shape
    hw = hgt * wdt
    nhw = n * hw
    assert nhw % 128 == 0, "N*H*W must be lane-dense (multiple of 128)"

    # Fold batch into lanes: (N, C, HW) -> (C, N*HW); append the constant-1
    # bias row.  Tiny, fused under jit.
    x = x_nchw.reshape(n, c, hw).transpose(1, 0, 2).reshape(c, nhw)
    x_aug = jnp.concatenate(
        [x.astype(jnp.float32), jnp.ones((1, nhw), jnp.float32)], axis=0)  # (C+1, NHW)

    out = pl.pallas_call(
        cerberus_kernel,
        grid=(1,),
        in_specs=[
            pl.BlockSpec((c + 1, nhw), lambda i: (0, 0)),
            pl.BlockSpec(win_aug.shape, lambda i: (0, 0)),
            pl.BlockSpec(w1f_t.shape, lambda i: (0, 0)),
            pl.BlockSpec(w2_t.shape, lambda i: (0, 0)),
        ],
        out_specs=pl.BlockSpec((3 * C_OUT, nhw), lambda i: (0, 0)),
        out_shape=jax.ShapeDtypeStruct((3 * C_OUT, nhw), jnp.float32),
        compiler_params=pltpu.CompilerParams(
            dimension_semantics=("arbitrary",)),
    )(x_aug, win_aug, w1f_t, w2_t)

    # Split packed output: rows = (quantile, channel), lanes = (image, pixel).
    out5 = (out.reshape(3, C_OUT, n, hw)
               .transpose(0, 2, 1, 3)
               .reshape(3, n, C_OUT, hgt, wdt))
    return out5[0], out5[1], out5[2]


# ---------------- pure-JAX reference (uses the unpacked weights) ----------------
def cerberus_reference(x_nchw, params):
    n, c, hgt, wdt = x_nchw.shape
    x = jnp.transpose(x_nchw, (0, 2, 3, 1)).reshape(-1, c)
    o = x
    feat = jnp.maximum(x @ params["wb"] + params["bb"], 0.0)

    def head(suf):
        hh = jnp.maximum(
            feat @ params["w1f_" + suf] + o @ params["w1o_" + suf] + params["b1_" + suf],
            0.0)
        return hh @ params["w2_" + suf] + params["b2_" + suf]

    median = head("m")
    lower = median - _softplus(head("l"))
    upper = median + _softplus(head("u"))
    clip = lambda a: jnp.minimum(jnp.maximum(a, CLIP_LOW), CLIP_HIGH)
    lower, median, upper = clip(lower), clip(median), clip(upper)
    to_nchw = lambda a: jnp.transpose(a.reshape(n, hgt, wdt, C_OUT), (0, 3, 1, 2))
    return to_nchw(lower), to_nchw(median), to_nchw(upper)


# ---------------- deterministic parameter init ----------------
def init_params(key):
    keys = jax.random.split(key, 32)
    ki = iter(keys)

    def mk(shape, scale):
        return (scale * jax.random.normal(next(ki), shape)).astype(jnp.float32)

    params = {
        "wb": mk((C_IN, C_INT), 0.5),   # base 1x1 conv
        "bb": mk((1, C_INT), 0.1),
    }
    for suf in ("l", "m", "u"):
        params["w1f_" + suf] = mk((C_INT, C_HID), 0.3)   # feature part of concat
        params["w1o_" + suf] = mk((C_IN, C_HID), 0.3)    # skip-connection part
        params["b1_" + suf] = mk((1, C_HID), 0.1)
        params["w2_" + suf] = mk((C_HID, C_OUT), 0.3)
        params["b2_" + suf] = mk((1, C_OUT), 0.1)
    return params


if __name__ == "__main__":
    key = jax.random.PRNGKey(0)
    kx, kp = jax.random.split(key)
    x = jax.random.normal(kx, (N, C_IN, H, W), dtype=jnp.float32)
    params = init_params(kp)

    # Pack once (hoisted out of the hot path).
    win_aug, w1f_t, w2_t = pack_params(params)
    win_aug, w1f_t, w2_t = jax.block_until_ready((win_aug, w1f_t, w2_t))

    lo, med, hi = cerberus_forward(x, win_aug, w1f_t, w2_t)
    jax.block_until_ready((lo, med, hi))

    lo_r, med_r, hi_r = cerberus_reference(x, params)

    assert lo.shape == (N, C_OUT, H, W)
    assert med.shape == (N, C_OUT, H, W)
    assert hi.shape == (N, C_OUT, H, W)
    assert jnp.allclose(lo, lo_r, atol=1e-4, rtol=1e-4)
    assert jnp.allclose(med, med_r, atol=1e-4, rtol=1e-4)
    assert jnp.allclose(hi, hi_r, atol=1e-4, rtol=1e-4)
    # quantile ordering (preserved by the monotone clip)
    assert bool(jnp.all(lo <= med + 1e-5)) and bool(jnp.all(med <= hi + 1e-5))

    print("KERNEL_OK")
</pallas_src>

<mosaic_0001>
module attributes {stable_mosaic.version = 11 : i64} {
  func.func @cerberus_kernel(%arg0: i32, %arg1: memref<5x512xf32, #tpu.memory_space<vmem>>, %arg2: memref<84x5xf32, #tpu.memory_space<vmem>>, %arg3: memref<52x32xf32, #tpu.memory_space<vmem>>, %arg4: memref<24x52xf32, #tpu.memory_space<vmem>>, %arg5: memref<9x512xf32, #tpu.memory_space<vmem>>) attributes {dimension_semantics = [#tpu.dimension_semantics<arbitrary>], iteration_bounds = array<i64: 1>, scalar_prefetch = 0 : i64, scratch_operands = 0 : i64, tpu.core_type = #tpu.core_type<tc>, window_params = [{pipeline_mode = #tpu.pipeline_mode<synchronous>, transform_indices = @transform_0, window_bounds = array<i64: 5, 512>}, {pipeline_mode = #tpu.pipeline_mode<synchronous>, transform_indices = @transform_1, window_bounds = array<i64: 84, 5>}, {pipeline_mode = #tpu.pipeline_mode<synchronous>, transform_indices = @transform_2, window_bounds = array<i64: 52, 32>}, {pipeline_mode = #tpu.pipeline_mode<synchronous>, transform_indices = @transform_3, window_bounds = array<i64: 24, 52>}, {pipeline_mode = #tpu.pipeline_mode<synchronous>, transform_indices = @transform_4, window_bounds = array<i64: 9, 512>}]} {
    %c0 = arith.constant 0 : index
    %c0_0 = arith.constant 0 : index
    %0 = vector.load %arg1[%c0, %c0_0] : memref<5x512xf32, #tpu.memory_space<vmem>>, vector<5x512xf32>
    %c0_1 = arith.constant 0 : index
    %c0_2 = arith.constant 0 : index
    %1 = vector.load %arg2[%c0_1, %c0_2] : memref<84x5xf32, #tpu.memory_space<vmem>>, vector<84x5xf32>
    %cst = arith.constant dense<0.000000e+00> : vector<84x512xf32>
    %2 = tpu.matmul %1, %0, %cst {dimension_numbers = #tpu.dot_dimension_numbers<[1], [0], [0], [1], [0, 0, 1, 1], [], []>} : vector<84x5xf32>, vector<5x512xf32>, vector<84x512xf32> -> vector<84x512xf32>
    %3 = vector.extract_strided_slice %2 {offsets = [0, 0], sizes = [32, 512], strides = [1, 1]} : vector<84x512xf32> to vector<32x512xf32>
    %cst_3 = arith.constant 0.000000e+00 : f32
    %4 = vector.broadcast %cst_3 : f32 to vector<32x512xf32>
    %5 = arith.maximumf %3, %4 : vector<32x512xf32>
    %6 = vector.extract_strided_slice %2 {offsets = [32, 0], sizes = [52, 512], strides = [1, 1]} : vector<84x512xf32> to vector<52x512xf32>
    %c0_4 = arith.constant 0 : index
    %c0_5 = arith.constant 0 : index
    %7 = vector.load %arg3[%c0_4, %c0_5] : memref<52x32xf32, #tpu.memory_space<vmem>>, vector<52x32xf32>
    %cst_6 = arith.constant dense<0.000000e+00> : vector<52x512xf32>
    %8 = tpu.matmul %7, %5, %cst_6 {dimension_numbers = #tpu.dot_dimension_numbers<[1], [0], [0], [1], [0, 0, 1, 1], [], []>} : vector<52x32xf32>, vector<32x512xf32>, vector<52x512xf32> -> vector<52x512xf32>
    %9 = arith.addf %8, %6 : vector<52x512xf32>
    %cst_7 = arith.constant 0.000000e+00 : f32
    %10 = vector.broadcast %cst_7 : f32 to vector<52x512xf32>
    %11 = arith.maximumf %9, %10 : vector<52x512xf32>
    %c0_8 = arith.constant 0 : index
    %c0_9 = arith.constant 0 : index
    %12 = vector.load %arg4[%c0_8, %c0_9] : memref<24x52xf32, #tpu.memory_space<vmem>>, vector<24x52xf32>
    %cst_10 = arith.constant dense<0.000000e+00> : vector<24x512xf32>
    %13 = tpu.matmul %12, %11, %cst_10 {dimension_numbers = #tpu.dot_dimension_numbers<[1], [0], [0], [1], [0, 0, 1, 1], [], []>} : vector<24x52xf32>, vector<52x512xf32>, vector<24x512xf32> -> vector<24x512xf32>
    %14 = vector.extract_strided_slice %13 {offsets = [0, 0], sizes = [3, 512], strides = [1, 1]} : vector<24x512xf32> to vector<3x512xf32>
    %15 = vector.extract_strided_slice %13 {offsets = [8, 0], sizes = [3, 512], strides = [1, 1]} : vector<24x512xf32> to vector<3x512xf32>
    %16 = vector.extract_strided_slice %13 {offsets = [16, 0], sizes = [3, 512], strides = [1, 1]} : vector<24x512xf32> to vector<3x512xf32>
    %cst_11 = arith.constant 0.000000e+00 : f32
    %17 = vector.broadcast %cst_11 : f32 to vector<3x512xf32>
    %18 = arith.maximumf %14, %17 : vector<3x512xf32>
    %19 = math.absf %14 : vector<3x512xf32>
    %cst_12 = arith.constant 0.000000e+00 : f32
    %20 = vector.broadcast %cst_12 : f32 to vector<3x512xf32>
    %21 = arith.subf %20, %19 : vector<3x512xf32>
    %22 = math.exp %21 : vector<3x512xf32>
    %23 = math.log1p %22 : vector<3x512xf32>
    %24 = arith.addf %18, %23 : vector<3x512xf32>
    %25 = arith.subf %15, %24 : vector<3x512xf32>
    %cst_13 = arith.constant 0.000000e+00 : f32
    %26 = vector.broadcast %cst_13 : f32 to vector<3x512xf32>
    %27 = arith.maximumf %16, %26 : vector<3x512xf32>
    %28 = math.absf %16 : vector<3x512xf32>
    %cst_14 = arith.constant 0.000000e+00 : f32
    %29 = vector.broadcast %cst_14 : f32 to vector<3x512xf32>
    %30 = arith.subf %29, %28 : vector<3x512xf32>
    %31 = math.exp %30 : vector<3x512xf32>
    %32 = math.log1p %31 : vector<3x512xf32>
    %33 = arith.addf %27, %32 : vector<3x512xf32>
    %34 = arith.addf %15, %33 : vector<3x512xf32>
    %cst_15 = arith.constant -2.000000e+00 : f32
    %35 = vector.broadcast %cst_15 : f32 to vector<3x512xf32>
    %36 = arith.maximumf %25, %35 : vector<3x512xf32>
    %cst_16 = arith.constant 2.000000e+00 : f32
    %37 = vector.broadcast %cst_16 : f32 to vector<3x512xf32>
    %38 = arith.minimumf %36, %37 : vector<3x512xf32>
    %cst_17 = arith.constant -2.000000e+00 : f32
    %39 = vector.broadcast %cst_17 : f32 to vector<3x512xf32>
    %40 = arith.maximumf %15, %39 : vector<3x512xf32>
    %cst_18 = arith.constant 2.000000e+00 : f32
    %41 = vector.broadcast %cst_18 : f32 to vector<3x512xf32>
    %42 = arith.minimumf %40, %41 : vector<3x512xf32>
    %cst_19 = arith.constant -2.000000e+00 : f32
    %43 = vector.broadcast %cst_19 : f32 to vector<3x512xf32>
    %44 = arith.maximumf %34, %43 : vector<3x512xf32>
    %cst_20 = arith.constant 2.000000e+00 : f32
    %45 = vector.broadcast %cst_20 : f32 to vector<3x512xf32>
    %46 = arith.minimumf %44, %45 : vector<3x512xf32>
    %47 = tpu.concatenate %38, %42, %46 in 0 : vector<3x512xf32>, vector<3x512xf32>, vector<3x512xf32> -> vector<9x512xf32>
    %c0_21 = arith.constant 0 : index
    %c0_22 = arith.constant 0 : index
    %48 = vector.load %arg5[%c0_21, %c0_22] : memref<9x512xf32, #tpu.memory_space<vmem>>, vector<9x512xf32>
    tpu.vector_store %arg5[%c0_21, %c0_22], %47 {strides = array<i32>} : memref<9x512xf32, #tpu.memory_space<vmem>>, vector<9x512xf32>,
    return
  }
  func.func @transform_0(%arg0: i32) -> (i32, i32) {
    %c0_i32 = arith.constant 0 : i32
    %c0_i32_0 = arith.constant 0 : i32
    %c0_i32_1 = arith.constant 0 : i32
    return %c0_i32, %c0_i32_0 : i32, i32
  }
  func.func @transform_1(%arg0: i32) -> (i32, i32) {
    %c0_i32 = arith.constant 0 : i32
    %c0_i32_0 = arith.constant 0 : i32
    %c0_i32_1 = arith.constant 0 : i32
    return %c0_i32, %c0_i32_0 : i32, i32
  }
  func.func @transform_2(%arg0: i32) -> (i32, i32) {
    %c0_i32 = arith.constant 0 : i32
    %c0_i32_0 = arith.constant 0 : i32
    %c0_i32_1 = arith.constant 0 : i32
    return %c0_i32, %c0_i32_0 : i32, i32
  }
  func.func @transform_3(%arg0: i32) -> (i32, i32) {
    %c0_i32 = arith.constant 0 : i32
    %c0_i32_0 = arith.constant 0 : i32
    %c0_i32_1 = arith.constant 0 : i32
    return %c0_i32, %c0_i32_0 : i32, i32
  }
  func.func @transform_4(%arg0: i32) -> (i32, i32) {
    %c0_i32 = arith.constant 0 : i32
    %c0_i32_0 = arith.constant 0 : i32
    %c0_i32_1 = arith.constant 0 : i32
    return %c0_i32, %c0_i32_0 : i32, i32
  }
}

</mosaic_0001>

<llo_original>
// kernel: squeeze.3
$region0: #{squeeze.3}
  %s0 = inlined_call_operand.vmem [shape: f32[1,2,3,256], index: 0, kind: input, shape index: {}]
  %s1 = inlined_call_operand.vmem [shape: f32[2,3,16,16], index: 1, kind: output, shape index: {}]
  $region1: #{squeeze.3} parent=0
    #allocation0 [shape = 'u8[24576]{0}', space=vmem, size = 0x6000, scoped, tag = 'scoped mem for input reshape']
    %s3 = sshllo.u32 0, 2
    %s4 = smul.addr 2, 5
    %s5 = scalar_lea.vmem %s0, %s4
    %v6 = vld [vmem:[%s5] sm:%s3]
    %s7 = scalar_lea.vmem [#allocation0], 40
    %8 = vst [vmem:[%s7] sm:%s3] %v6
    %s9 = smul.addr 2, 4
    %s10 = scalar_lea.vmem %s0, %s9
    %v11 = vld [vmem:[%s10] sm:%s3]
    %s12 = scalar_lea.vmem [#allocation0], 32
    %13 = vst [vmem:[%s12] sm:%s3] %v11
    %s14 = smul.addr 2, 3
    %s15 = scalar_lea.vmem %s0, %s14
    %v16 = vld [vmem:[%s15] sm:%s3]
    %s17 = scalar_lea.vmem [#allocation0], 24
    %18 = vst [vmem:[%s17] sm:%s3] %v16
    %s19 = smul.addr 2, 2
    %s20 = scalar_lea.vmem %s0, %s19
    %v21 = vld [vmem:[%s20] sm:%s3]
    %s22 = scalar_lea.vmem [#allocation0], 16
    %23 = vst [vmem:[%s22] sm:%s3] %v21
    %s24 = scalar_lea.vmem %s0, 2
    %v25 = vld [vmem:[%s24] sm:%s3]
    %s26 = scalar_lea.vmem [#allocation0], 8
    %27 = vst [vmem:[%s26] sm:%s3] %v25
    %v28 = vld [vmem:[%s0] sm:%s3]
    %29 = vst [vmem:[#allocation0] sm:%s3] %v28
    %v30 = vld [vmem:[#allocation0] sm:$0x3]
    %vm31 = vcmask 130048
    %32 = vst.msk [vmem:[%s1] ss:$16 sm:$0x3] %vm31, %v30
    %s33 = scalar_lea.vmem [#allocation0], 8
    %v34 = vld [vmem:[%s33] sm:$0x3]
    %vm35 = vcmask 130048
    %s36 = scalar_lea.vmem %s1, 8
    %37 = vst.msk [vmem:[%s36] ss:$16 sm:$0x3] %vm35, %v34
    %s38 = scalar_lea.vmem [#allocation0], 16
    %v39 = vld [vmem:[%s38] sm:$0x3]
    %vm40 = vcmask 130048
    %s41 = scalar_lea.vmem %s1, 32
    %42 = vst.msk [vmem:[%s41] ss:$16 sm:$0x3] %vm40, %v39
    %s43 = scalar_lea.vmem [#allocation0], 24
    %v44 = vld [vmem:[%s43] sm:$0x3]
    %vm45 = vcmask 130048
    %s46 = scalar_lea.vmem %s1, 40
    %47 = vst.msk [vmem:[%s46] ss:$16 sm:$0x3] %vm45, %v44
    %s48 = scalar_lea.vmem [#allocation0], 32
    %v49 = vld [vmem:[%s48] sm:$0x3]
    %vm50 = vcmask 130048
    %s51 = scalar_lea.vmem %s1, 64
    %52 = vst.msk [vmem:[%s51] ss:$16 sm:$0x3] %vm50, %v49
    %s53 = scalar_lea.vmem [#allocation0], 40
    %v54 = vld [vmem:[%s53] sm:$0x3]
    %vm55 = vcmask 130048
    %s56 = scalar_lea.vmem %s1, 72
    %57 = vst.msk [vmem:[%s56] ss:$16 sm:$0x3] %vm55, %v54
    %v58 = vld.sshfl [vmem:[#allocation0] sm:$0xff pattern:$0x99999180]
    %s59 = scalar_lea.vmem [#allocation0], 16
    %v60 = vld.sshfl [vmem:[%s59] sm:$0xff pattern:$0x91800000]
    %vm61 = vcmask 1047556
    %v62 = vsel %vm61, %v60, %v58
    %63 = vrot.lane.b32.xlu0 %v62, 112
    %v64 = vpop.permute.xlu0 %63
    %vm65 = vcmask 130048
    %s66 = scalar_lea.vmem %s1, 1
    %67 = vst.msk [vmem:[%s66] ss:$8 sm:$0xf] %vm65, %v64
    %s68 = scalar_lea.vmem %s1, 1
    %69 = vst.msk [vmem:[%s68] ss:$8 sm:$0xf0] %vm65, %v64
    %s70 = scalar_lea.vmem [#allocation0], 32
    %v71 = vld.sshfl [vmem:[%s70] sm:$0xff pattern:$0x99999180]
    %72 = vrot.lane.b32.xlu0 %v71, 112
    %v73 = vpop.permute.xlu0 %72
    %vm74 = vcmask 130048
    %s75 = scalar_lea.vmem %s1, 65
    %76 = vst.msk [vmem:[%s75] ss:$8 sm:$0xf] %vm74, %v73
    %v77 = vld.sshfl [vmem:[#allocation0] sm:$0xff pattern:$0x99999180]
    %s78 = scalar_lea.vmem [#allocation0], 16
    %v79 = vld.sshfl [vmem:[%s78] sm:$0xff pattern:$0x91800000]
    %vm80 = vcmask 1047556
    %v81 = vsel %vm80, %v79, %v77
    %82 = vrot.lane.b32.xlu0 %v81, 96
    %v83 = vpop.permute.xlu0 %82
    %vm84 = vcmask 130048
    %s85 = scalar_lea.vmem %s1, 2
    %86 = vst.msk [vmem:[%s85] ss:$8 sm:$0xf] %vm84, %v83
    %s87 = scalar_lea.vmem %s1, 2
    %88 = vst.msk [vmem:[%s87] ss:$8 sm:$0xf0] %vm84, %v83
    %s89 = scalar_lea.vmem [#allocation0], 32
    %v90 = vld.sshfl [vmem:[%s89] sm:$0xff pattern:$0x99999180]
    %91 = vrot.lane.b32.xlu0 %v90, 96
    %v92 = vpop.permute.xlu0 %91
    %vm93 = vcmask 130048
    %s94 = scalar_lea.vmem %s1, 66
    %95 = vst.msk [vmem:[%s94] ss:$8 sm:$0xf] %vm93, %v92
    %v96 = vld.sshfl [vmem:[#allocation0] sm:$0xff pattern:$0x99999180]
    %s97 = scalar_lea.vmem [#allocation0], 16
    %v98 = vld.sshfl [vmem:[%s97] sm:$0xff pattern:$0x91800000]
    %vm99 = vcmask 1047556
    %v100 = vsel %vm99, %v98, %v96
    %101 = vrot.lane.b32.xlu0 %v100, 80
    %v102 = vpop.permute.xlu0 %101
    %vm103 = vcmask 130048
    %s104 = scalar_lea.vmem %s1, 3
    %105 = vst.msk [vmem:[%s104] ss:$8 sm:$0xf] %vm103, %v102
    %s106 = scalar_lea.vmem %s1, 3
    %107 = vst.msk [vmem:[%s106] ss:$8 sm:$0xf0] %vm103, %v102
    %s108 = scalar_lea.vmem [#allocation0], 32
    %v109 = vld.sshfl [vmem:[%s108] sm:$0xff pattern:$0x99999180]
    %110 = vrot.lane.b32.xlu0 %v109, 80
    %v111 = vpop.permute.xlu0 %110
    %vm112 = vcmask 130048
    %s113 = scalar_lea.vmem %s1, 67
    %114 = vst.msk [vmem:[%s113] ss:$8 sm:$0xf] %vm112, %v111
    %v115 = vld.sshfl [vmem:[#allocation0] sm:$0xff pattern:$0x99999180]
    %s116 = scalar_lea.vmem [#allocation0], 16
    %v117 = vld.sshfl [vmem:[%s116] sm:$0xff pattern:$0x91800000]
    %vm118 = vcmask 1047556
    %v119 = vsel %vm118, %v117, %v115
    %120 = vrot.lane.b32.xlu0 %v119, 64
    %v121 = vpop.permute.xlu0 %120
    %vm122 = vcmask 130048
    %s123 = scalar_lea.vmem %s1, 4
    %124 = vst.msk [vmem:[%s123] ss:$8 sm:$0xf] %vm122, %v121
    %s125 = scalar_lea.vmem %s1, 4
    %126 = vst.msk [vmem:[%s125] ss:$8 sm:$0xf0] %vm122, %v121
    %s127 = scalar_lea.vmem [#allocation0], 32
    %v128 = vld.sshfl [vmem:[%s127] sm:$0xff pattern:$0x99999180]
    %129 = vrot.lane.b32.xlu0 %v128, 64
    %v130 = vpop.permute.xlu0 %129
    %vm131 = vcmask 130048
    %s132 = scalar_lea.vmem %s1, 68
    %133 = vst.msk [vmem:[%s132] ss:$8 sm:$0xf] %vm131, %v130
    %v134 = vld.sshfl [vmem:[#allocation0] sm:$0xff pattern:$0x99999180]
    %s135 = scalar_lea.vmem [#allocation0], 16
    %v136 = vld.sshfl [vmem:[%s135] sm:$0xff pattern:$0x91800000]
    %vm137 = vcmask 1047556
    %v138 = vsel %vm137, %v136, %v134
    %139 = vrot.lane.b32.xlu0 %v138, 48
    %v140 = vpop.permute.xlu0 %139
    %vm141 = vcmask 130048
    %s142 = scalar_lea.vmem %s1, 5
    %143 = vst.msk [vmem:[%s142] ss:$8 sm:$0xf] %vm141, %v140
    %s144 = scalar_lea.vmem %s1, 5
    %145 = vst.msk [vmem:[%s144] ss:$8 sm:$0xf0] %vm141, %v140
    %s146 = scalar_lea.vmem [#allocation0], 32
    %v147 = vld.sshfl [vmem:[%s146] sm:$0xff pattern:$0x99999180]
    %148 = vrot.lane.b32.xlu0 %v147, 48
    %v149 = vpop.permute.xlu0 %148
    %vm150 = vcmask 130048
    %s151 = scalar_lea.vmem %s1, 69
    %152 = vst.msk [vmem:[%s151] ss:$8 sm:$0xf] %vm150, %v149
    %v153 = vld.sshfl [vmem:[#allocation0] sm:$0xff pattern:$0x99999180]
    %s154 = scalar_lea.vmem [#allocation0], 16
    %v155 = vld.sshfl [vmem:[%s154] sm:$0xff pattern:$0x91800000]
    %vm156 = vcmask 1047556
    %v157 = vsel %vm156, %v155, %v153
    %158 = vrot.lane.b32.xlu0 %v157, 32
    %v159 = vpop.permute.xlu0 %158
    %vm160 = vcmask 130048
    %s161 = scalar_lea.vmem %s1, 6
    %162 = vst.msk [vmem:[%s161] ss:$8 sm:$0xf] %vm160, %v159
    %s163 = scalar_lea.vmem %s1, 6
    %164 = vst.msk [vmem:[%s163] ss:$8 sm:$0xf0] %vm160, %v159
    %s165 = scalar_lea.vmem [#allocation0], 32
    %v166 = vld.sshfl [vmem:[%s165] sm:$0xff pattern:$0x99999180]
    %167 = vrot.lane.b32.xlu0 %v166, 32
    %v168 = vpop.permute.xlu0 %167
    %vm169 = vcmask 130048
    %s170 = scalar_lea.vmem %s1, 70
    %171 = vst.msk [vmem:[%s170] ss:$8 sm:$0xf] %vm169, %v168
    %v172 = vld.sshfl [vmem:[#allocation0] sm:$0xff pattern:$0x99999180]
    %s173 = scalar_lea.vmem [#allocation0], 16
    %v174 = vld.sshfl [vmem:[%s173] sm:$0xff pattern:$0x91800000]
    %vm175 = vcmask 1047556
    %v176 = vsel %vm175, %v174, %v172
    %177 = vrot.lane.b32.xlu0 %v176, 16
    %v178 = vpop.permute.xlu0 %177
    %vm179 = vcmask 130048
    %s180 = scalar_lea.vmem %s1, 7
    %181 = vst.msk [vmem:[%s180] ss:$8 sm:$0xf] %vm179, %v178
    %s182 = scalar_lea.vmem %s1, 7
    %183 = vst.msk [vmem:[%s182] ss:$8 sm:$0xf0] %vm179, %v178
    %s184 = scalar_lea.vmem [#allocation0], 32
    %v185 = vld.sshfl [vmem:[%s184] sm:$0xff pattern:$0x99999180]
    %186 = vrot.lane.b32.xlu0 %v185, 16
    %v187 = vpop.permute.xlu0 %186
    %vm188 = vcmask 130048
    %s189 = scalar_lea.vmem %s1, 71
    %190 = vst.msk [vmem:[%s189] ss:$8 sm:$0xf] %vm188, %v187

// kernel: cerberus_forward.1
$region0: #{cerberus_forward.1}
  #allocation0 [shape = 'u32[]', space=smem, size = 0x4, offset = 0x4, fixed_abs, tag = 'smem constant byte address 0x4 - core index']
  #allocation1 [shape = 'u32[144,128]{1,0:T(1,128)}', space=vmem, size = 0x12000, scoped, tag = 'internal scratch']
  %s0 = inlined_call_operand.vmem [shape: f32[5,512], index: 0, kind: input, shape index: {}]
  %s1 = inlined_call_operand.vmem [shape: f32[84,5], index: 1, kind: input, shape index: {}]
  %s2 = inlined_call_operand.vmem [shape: f32[52,32], index: 2, kind: input, shape index: {}]
  %s3 = inlined_call_operand.vmem [shape: f32[24,52], index: 3, kind: input, shape index: {}]
  %s4 = inlined_call_operand.vmem [shape: f32[9,512], index: 4, kind: output, shape index: {}]
  %s5 = sld [smem:[#allocation0]]
  $region26: #{cerberus_forward.1} parent=0
    _
  %s7 = ssub.s32 1, %s5
  %s8 = scalar_select 0, %s7, %s5
  // Predicated region
  $region2: #{cerberus_forward.1} parent=0 // pred_check
    _
  $region3: #{cerberus_forward.1} parent=0 // pred_check_branch
    %10 = sbr.rel (0) target = $region5
  $region4: #{cerberus_forward.1} parent=0 // pred_region
    _
  $region5: #{cerberus_forward.1} parent=0 // pred_fallthru
    _
  // Predicated region
  $region6: #{cerberus_forward.1} parent=0 // pred_check
    _
  $region7: #{cerberus_forward.1} parent=0 // pred_check_branch
    %12 = sbr.rel (0) target = $region9
  $region8: #{cerberus_forward.1} parent=0 // pred_region
    _
  $region9: #{cerberus_forward.1} parent=0 // pred_fallthru
    _
  // Predicated region
  $region10: #{cerberus_forward.1} parent=0 // pred_check
    _
  $region11: #{cerberus_forward.1} parent=0 // pred_check_branch
    %14 = sbr.rel (0) target = $region13
  $region12: #{cerberus_forward.1} parent=0 // pred_region
    _
  $region13: #{cerberus_forward.1} parent=0 // pred_fallthru
    _
  // Predicated region
  $region14: #{cerberus_forward.1} parent=0 // pred_check
    _
  $region15: #{cerberus_forward.1} parent=0 // pred_check_branch
    %16 = sbr.rel (0) target = $region17
  $region16: #{cerberus_forward.1} parent=0 // pred_region
    _
  $region17: #{cerberus_forward.1} parent=0 // pred_fallthru
    _
  %v17 = vld [vmem:[%s0] sm:$0x1f]
  %v18 = vld [vmem:[%s0 + $0x8] sm:$0x1f]
  %v19 = vld [vmem:[%s0 + $0x10] sm:$0x1f]
  %v20 = vld [vmem:[%s0 + $0x18] sm:$0x1f]
  %v21 = vld [vmem:[%s1] sm:$0xff]
  %v22 = vld [vmem:[%s1 + $0x8] sm:$0xff]
  %v23 = vld [vmem:[%s1 + $0x10] sm:$0xff]
  %v24 = vld [vmem:[%s1 + $0x18] sm:$0xff]
  %v25 = vld [vmem:[%s1 + $0x20] sm:$0xff]
  %v26 = vld [vmem:[%s1 + $0x28] sm:$0xff]
  %v27 = vld [vmem:[%s1 + $0x30] sm:$0xff]
  %v28 = vld [vmem:[%s1 + $0x38] sm:$0xff]
  %v29 = vld [vmem:[%s1 + $0x40] sm:$0xff]
  %v30 = vld [vmem:[%s1 + $0x48] sm:$0xff]
  %v31 = vld [vmem:[%s1 + $0x50] sm:$0xf]
  %vm32 = vcmask 39936
  %v34 = vsel %vm32, %v21, 0
  %v37 = vsel %vm32, %v22, 0
  %v40 = vsel %vm32, %v23, 0
  %v43 = vsel %vm32, %v24, 0
  %v46 = vsel %vm32, %v25, 0
  %v49 = vsel %vm32, %v26, 0
  %v52 = vsel %vm32, %v27, 0
  %v55 = vsel %vm32, %v28, 0
  %v58 = vsel %vm32, %v29, 0
  %v61 = vsel %vm32, %v30, 0
  %v64 = vsel %vm32, %v31, 0
  %vm66 = vcmask 1044480
  %v68 = vsel %vm66, %v17, 0
  %v71 = vsel %vm66, %v18, 0
  %v74 = vsel %vm66, %v19, 0
  %v77 = vsel %vm66, %v20, 0
  %79 = vmatprep.subr.mxu0 %v71
  %80 = vmatpush1.msra.mxu0 %v68
  %81 = vmatprep.subr.mxu0 0.0
  %82 = vmatpush1.msra.mxu0 0.0
  %83 = vmatprep.subr.mxu0 0.0
  %84 = vmatpush1.msra.mxu0 0.0
  %85 = vmatprep.subr.mxu0 0.0
  %86 = vmatpush1.msra.mxu0 0.0
  %87 = vmatprep.subr.mxu0 0.0
  %88 = vmatpush1.msra.mxu0 0.0
  %89 = vmatprep.subr.mxu0 0.0
  %90 = vmatpush1.msra.mxu0 0.0
  %91 = vmatprep.subr.mxu0 0.0
  %92 = vmatpush1.msra.mxu0 0.0
  %93 = vmatprep.subr.mxu0 0.0
  %94 = vmatpush1.msra.mxu0 0.0
  %95 = vmatprep.subr.mxu0 0.0
  %96 = vmatpush1.msra.mxu0 0.0
  %97 = vmatprep.subr.mxu0 0.0
  %98 = vmatpush1.msra.mxu0 0.0
  %99 = vmatprep.subr.mxu0 0.0
  %100 = vmatpush1.msra.mxu0 0.0
  %101 = vmatprep.subr.mxu0 0.0
  %102 = vmatpush1.msra.mxu0 0.0
  %103 = vmatprep.subr.mxu0 0.0
  %104 = vmatpush1.msra.mxu0 0.0
  %105 = vmatprep.subr.mxu0 0.0
  %106 = vmatpush1.msra.mxu0 0.0
  %107 = vmatprep.subr.mxu0 0.0
  %108 = vmatpush1.msra.mxu0 0.0
  %109 = vmatprep.subr.mxu0 0.0
  %110 = vmatpush1.msra.mxu0 0.0
  %111 = vmatprep.subr.mxu0 0.0
  %112 = vmatpush1.msra.mxu0 0.0
  %113 = vmatprep.subr.mxu0 0.0
  %114 = vmatpush1.msra.mxu0 0.0
  %115 = vmatprep.subr.mxu0 0.0
  %116 = vmatpush1.msra.mxu0 0.0
  %117 = vmatprep.subr.mxu0 0.0
  %118 = vmatpush1.msra.mxu0 0.0
  %119 = vmatprep.subr.mxu0 0.0
  %120 = vmatpush1.msra.mxu0 0.0
  %121 = vmatprep.subr.mxu0 0.0
  %122 = vmatpush1.msra.mxu0 0.0
  %123 = vmatprep.subr.mxu0 0.0
  %124 = vmatpush1.msra.mxu0 0.0
  %125 = vmatprep.subr.mxu0 0.0
  %126 = vmatpush1.msra.mxu0 0.0
  %127 = vmatprep.subr.mxu0 0.0
  %128 = vmatpush1.msra.mxu0 0.0
  %129 = vmatprep.subr.mxu0 0.0
  %130 = vmatpush1.msra.mxu0 0.0
  %131 = vmatprep.subr.mxu0 0.0
  %132 = vmatpush1.msra.mxu0 0.0
  %133 = vmatprep.subr.mxu0 0.0
  %134 = vmatpush1.msra.mxu0 0.0
  %135 = vmatprep.subr.mxu0 0.0
  %136 = vmatpush1.msra.mxu0 0.0
  %137 = vmatprep.subr.mxu0 0.0
  %138 = vmatpush1.msra.mxu0 0.0
  %139 = vmatprep.subr.mxu0 0.0
  %140 = vmatpush1.msra.mxu0 0.0
  %141 = vmatprep.subr.mxu0 0.0
  %142 = vmatpush1.msra.mxu0 0.0
  %143 = vmatprep.mubr.f32.mxu0 0.0
  %144 = vmatmul.mubr.f32.gmra.mrb[0].mxu0 %v34
  %v145 = vpop.f32.mrb[0].mxu0
  %v146 = vadd.f32 0.0, %v145
  %v147 = vpop.f32.mrb[0].mxu0
  %v148 = vadd.f32 0.0, %v147
  %149 = vmatprep.mubr.f32.mxu0 0.0
  %150 = vmatmul.mubr.f32.gmra.mrb[0].mxu0 %v37
  %v151 = vpop.f32.mrb[0].mxu0
  %v152 = vadd.f32 0.0, %v151
  %v153 = vpop.f32.mrb[0].mxu0
  %v154 = vadd.f32 0.0, %v153
  %155 = vmatprep.mubr.f32.mxu0 0.0
  %156 = vmatmul.mubr.f32.gmra.mrb[0].mxu0 %v40
  %v157 = vpop.f32.mrb[0].mxu0
  %v158 = vadd.f32 0.0, %v157
  %v159 = vpop.f32.mrb[0].mxu0
  %v160 = vadd.f32 0.0, %v159
  %161 = vmatprep.mubr.f32.mxu0 0.0
  %162 = vmatmul.mubr.f32.gmra.mrb[0].mxu0 %v43
  %v163 = vpop.f32.mrb[0].mxu0
  %v164 = vadd.f32 0.0, %v163
  %v165 = vpop.f32.mrb[0].mxu0
  %v166 = vadd.f32 0.0, %v165
  %167 = vmatprep.mubr.f32.mxu0 0.0
  %168 = vmatmul.mubr.f32.gmra.mrb[0].mxu0 %v46
  %v169 = vpop.f32.mrb[0].mxu0
  %v170 = vadd.f32 0.0, %v169
  %v171 = vpop.f32.mrb[0].mxu0
  %v172 = vadd.f32 0.0, %v171
  %173 = vmatprep.mubr.f32.mxu0 0.0
  %174 = vmatmul.mubr.f32.gmra.mrb[0].mxu0 %v49
  %v175 = vpop.f32.mrb[0].mxu0
  %v176 = vadd.f32 0.0, %v175
  %v177 = vpop.f32.mrb[0].mxu0
  %v178 = vadd.f32 0.0, %v177
  %179 = vmatprep.mubr.f32.mxu0 0.0
  %180 = vmatmul.mubr.f32.gmra.mrb[0].mxu0 %v52
  %v181 = vpop.f32.mrb[0].mxu0
  %v182 = vadd.f32 0.0, %v181
  %v183 = vpop.f32.mrb[0].mxu0
  %v184 = vadd.f32 0.0, %v183
  %185 = vmatprep.mubr.f32.mxu0 0.0
  %186 = vmatmul.mubr.f32.gmra.mrb[0].mxu0 %v55
  %v187 = vpop.f32.mrb[0].mxu0
  %v188 = vadd.f32 0.0, %v187
  %v189 = vpop.f32.mrb[0].mxu0
  %v190 = vadd.f32 0.0, %v189
  %191 = vmatprep.mubr.f32.mxu0 0.0
  %192 = vmatmul.mubr.f32.gmra.mrb[0].mxu0 %v58
  %v193 = vpop.f32.mrb[0].mxu0
  %v194 = vadd.f32 0.0, %v193
  %v195 = vpop.f32.mrb[0].mxu0
  %v196 = vadd.f32 0.0, %v195
  %197 = vmatprep.mubr.f32.mxu0 0.0
  %198 = vmatmul.mubr.f32.gmra.mrb[0].mxu0 %v61
  %v199 = vpop.f32.mrb[0].mxu0
  %v200 = vadd.f32 0.0, %v199
  %v201 = vpop.f32.mrb[0].mxu0
  %v202 = vadd.f32 0.0, %v201
  %203 = vmatprep.mubr.f32.mxu0 0.0
  %204 = vmatmul.mubr.f32.gmra.mrb[0].mxu0 %v64
  %v205 = vpop.f32.mrb[0].mxu0
  %v206 = vadd.f32 0.0, %v205
  %v207 = vpop.f32.mrb[0].mxu0
  %v208 = vadd.f32 0.0, %v207
  %209 = vdwg.mxu0
  %210 = vmatprep.subr.mxu0 %v77
  %211 = vmatpush1.msra.mxu0 %v74
  %212 = vmatprep.subr.mxu0 0.0
  %213 = vmatpush1.msra.mxu0 0.0
  %214 = vmatprep.subr.mxu0 0.0
  %215 = vmatpush1.msra.mxu0 0.0
  %216 = vmatprep.subr.mxu0 0.0
  %217 = vmatpush1.msra.mxu0 0.0
  %218 = vmatprep.subr.mxu0 0.0
  %219 = vmatpush1.msra.mxu0 0.0
  %220 = vmatprep.subr.mxu0 0.0
  %221 = vmatpush1.msra.mxu0 0.0
  %222 = vmatprep.subr.mxu0 0.0
  %223 = vmatpush1.msra.mxu0 0.0
  %224 = vmatprep.subr.mxu0 0.0
  %225 = vmatpush1.msra.mxu0 0.0
  %226 = vmatprep.subr.mxu0 0.0
  %227 = vmatpush1.msra.mxu0 0.0
  %228 = vmatprep.subr.mxu0 0.0
  %229 = vmatpush1.msra.mxu0 0.0
  %230 = vmatprep.subr.mxu0 0.0
  %231 = vmatpush1.msra.mxu0 0.0
  %232 = vmatprep.subr.mxu0 0.0
  %233 = vmatpush1.msra.mxu0 0.0
  %234 = vmatprep.subr.mxu0 0.0
  %235 = vmatpush1.msra.mxu0 0.0
  %236 = vmatprep.subr.mxu0 0.0
  %237 = vmatpush1.msra.mxu0 0.0
  %238 = vmatprep.subr.mxu0 0.0
  %239 = vmatpush1.msra.mxu0 0.0
  %240 = vmatprep.subr.mxu0 0.0
  %241 = vmatpush1.msra.mxu0 0.0
  %242 = vmatprep.subr.mxu0 0.0
  %243 = vmatpush1.msra.mxu0 0.0
  %244 = vmatprep.subr.mxu0 0.0
  %245 = vmatpush1.msra.mxu0 0.0
  %246 = vmatprep.subr.mxu0 0.0
  %247 = vmatpush1.msra.mxu0 0.0
  %248 = vmatprep.subr.mxu0 0.0
  %249 = vmatpush1.msra.mxu0 0.0
  %250 = vmatprep.subr.mxu0 0.0
  %251 = vmatpush1.msra.mxu0 0.0
  %252 = vmatprep.subr.mxu0 0.0
  %253 = vmatpush1.msra.mxu0 0.0
  %254 = vmatprep.subr.mxu0 0.0
  %255 = vmatpush1.msra.mxu0 0.0
  %256 = vmatprep.subr.mxu0 0.0
  %257 = vmatpush1.msra.mxu0 0.0
  %258 = vmatprep.subr.mxu0 0.0
  %259 = vmatpush1.msra.mxu0 0.0
  %260 = vmatprep.subr.mxu0 0.0
  %261 = vmatpush1.msra.mxu0 0.0
  %262 = vmatprep.subr.mxu0 0.0
  %263 = vmatpush1.msra.mxu0 0.0
  %264 = vmatprep.subr.mxu0 0.0
  %265 = vmatpush1.msra.mxu0 0.0
  %266 = vmatprep.subr.mxu0 0.0
  %267 = vmatpush1.msra.mxu0 0.0
  %268 = vmatprep.subr.mxu0 0.0
  %269 = vmatpush1.msra.mxu0 0.0
  %270 = vmatprep.subr.mxu0 0.0
  %271 = vmatpush1.msra.mxu0 0.0
  %272 = vmatprep.subr.mxu0 0.0
  %273 = vmatpush1.msra.mxu0 0.0
  %274 = vmatprep.mubr.f32.mxu0 0.0
  %275 = vmatmul.mubr.f32.gmra.mrb[0].mxu0 %v34
  %v276 = vpop.f32.mrb[0].mxu0
  %v277 = vadd.f32 0.0, %v276
  %v278 = vpop.f32.mrb[0].mxu0
  %v279 = vadd.f32 0.0, %v278
  %280 = vmatprep.mubr.f32.mxu0 0.0
  %281 = vmatmul.mubr.f32.gmra.mrb[0].mxu0 %v37
  %v282 = vpop.f32.mrb[0].mxu0
  %v283 = vadd.f32 0.0, %v282
  %v284 = vpop.f32.mrb[0].mxu0
  %v285 = vadd.f32 0.0, %v284
  %286 = vmatprep.mubr.f32.mxu0 0.0
  %287 = vmatmul.mubr.f32.gmra.mrb[0].mxu0 %v40
  %v288 = vpop.f32.mrb[0].mxu0
  %v289 = vadd.f32 0.0, %v288
  %v290 = vpop.f32.mrb[0].mxu0
  %v291 = vadd.f32 0.0, %v290
  %292 = vmatprep.mubr.f32.mxu0 0.0
  %293 = vmatmul.mubr.f32.gmra.mrb[0].mxu0 %v43
  %v294 = vpop.f32.mrb[0].mxu0
  %v295 = vadd.f32 0.0, %v294
  %v296 = vpop.f32.mrb[0].mxu0
  %v297 = vadd.f32 0.0, %v296
  %298 = vmatprep.mubr.f32.mxu0 0.0
  %299 = vmatmul.mubr.f32.gmra.mrb[0].mxu0 %v46
  %v300 = vpop.f32.mrb[0].mxu0
  %v301 = vadd.f32 0.0, %v300
  %v302 = vpop.f32.mrb[0].mxu0
  %v303 = vadd.f32 0.0, %v302
  %304 = vmatprep.mubr.f32.mxu0 0.0
  %305 = vmatmul.mubr.f32.gmra.mrb[0].mxu0 %v49
  %v306 = vpop.f32.mrb[0].mxu0
  %v307 = vadd.f32 0.0, %v306
  %v308 = vpop.f32.mrb[0].mxu0
  %v309 = vadd.f32 0.0, %v308
  %310 = vmatprep.mubr.f32.mxu0 0.0
  %311 = vmatmul.mubr.f32.gmra.mrb[0].mxu0 %v52
  %v312 = vpop.f32.mrb[0].mxu0
  %v313 = vadd.f32 0.0, %v312
  %v314 = vpop.f32.mrb[0].mxu0
  %v315 = vadd.f32 0.0, %v314
  %316 = vmatprep.mubr.f32.mxu0 0.0
  %317 = vmatmul.mubr.f32.gmra.mrb[0].mxu0 %v55
  %v318 = vpop.f32.mrb[0].mxu0
  %v319 = vadd.f32 0.0, %v318
  %v320 = vpop.f32.mrb[0].mxu0
  %v321 = vadd.f32 0.0, %v320
  %322 = vmatprep.mubr.f32.mxu0 0.0
  %323 = vmatmul.mubr.f32.gmra.mrb[0].mxu0 %v58
  %v324 = vpop.f32.mrb[0].mxu0
  %v325 = vadd.f32 0.0, %v324
  %v326 = vpop.f32.mrb[0].mxu0
  %v327 = vadd.f32 0.0, %v326
  %328 = vmatprep.mubr.f32.mxu0 0.0
  %329 = vmatmul.mubr.f32.gmra.mrb[0].mxu0 %v61
  %v330 = vpop.f32.mrb[0].mxu0
  %v331 = vadd.f32 0.0, %v330
  %v332 = vpop.f32.mrb[0].mxu0
  %v333 = vadd.f32 0.0, %v332
  %334 = vmatprep.mubr.f32.mxu0 0.0
  %335 = vmatmul.mubr.f32.gmra.mrb[0].mxu0 %v64
  %v336 = vpop.f32.mrb[0].mxu0
  %v337 = vadd.f32 0.0, %v336
  %v338 = vpop.f32.mrb[0].mxu0
  %v339 = vadd.f32 0.0, %v338
  %340 = vdwg.mxu0
  %v341 = vmax.f32 %v146, 0.0
  %v342 = vmax.f32 %v148, 0.0
  %v343 = vmax.f32 %v277, 0.0
  %v344 = vmax.f32 %v279, 0.0
  %v345 = vmax.f32 %v152, 0.0
  %v346 = vmax.f32 %v154, 0.0
  %v347 = vmax.f32 %v283, 0.0
  %v348 = vmax.f32 %v285, 0.0
  %v349 = vmax.f32 %v158, 0.0
  %v350 = vmax.f32 %v160, 0.0
  %v351 = vmax.f32 %v289, 0.0
  %v352 = vmax.f32 %v291, 0.0
  %v353 = vmax.f32 %v164, 0.0
  %v354 = vmax.f32 %v166, 0.0
  %v355 = vmax.f32 %v295, 0.0
  %v356 = vmax.f32 %v297, 0.0
  %v357 = vld [vmem:[%s2] sm:$0xff]
  %v358 = vld [vmem:[%s2 + $0x8] sm:$0xff]
  %v359 = vld [vmem:[%s2 + $0x10] sm:$0xff]
  %v360 = vld [vmem:[%s2 + $0x18] sm:$0xff]
  %v361 = vld [vmem:[%s2 + $0x20] sm:$0xff]
  %v362 = vld [vmem:[%s2 + $0x28] sm:$0xff]
  %v363 = vld [vmem:[%s2 + $0x30] sm:$0xf]
  %vm364 = vcmask 261120
  %v366 = vsel %vm364, %v357, 0
  %v369 = vsel %vm364, %v358, 0
  %v372 = vsel %vm364, %v359, 0
  %v375 = vsel %vm364, %v360, 0
  %v378 = vsel %vm364, %v361, 0
  %v381 = vsel %vm364, %v362, 0
  %v384 = vsel %vm364, %v363, 0
  %386 = vmatprep.subr.mxu0 %v342
  %387 = vmatpush1.msra.mxu0 %v341
  %388 = vmatprep.subr.mxu0 %v346
  %389 = vmatpush1.msra.mxu0 %v345
  %390 = vmatprep.subr.mxu0 %v350
  %391 = vmatpush1.msra.mxu0 %v349
  %392 = vmatprep.subr.mxu0 %v354
  %393 = vmatpush1.msra.mxu0 %v353
  %394 = vmatprep.subr.mxu0 0.0
  %395 = vmatpush1.msra.mxu0 0.0
  %396 = vmatprep.subr.mxu0 0.0
  %397 = vmatpush1.msra.mxu0 0.0
  %398 = vmatprep.subr.mxu0 0.0
  %399 = vmatpush1.msra.mxu0 0.0
  %400 = vmatprep.subr.mxu0 0.0
  %401 = vmatpush1.msra.mxu0 0.0
  %402 = vmatprep.subr.mxu0 0.0
  %403 = vmatpush1.msra.mxu0 0.0
  %404 = vmatprep.subr.mxu0 0.0
  %405 = vmatpush1.msra.mxu0 0.0
  %406 = vmatprep.subr.mxu0 0.0
  %407 = vmatpush1.msra.mxu0 0.0
  %408 = vmatprep.subr.mxu0 0.0
  %409 = vmatpush1.msra.mxu0 0.0
  %410 = vmatprep.subr.mxu0 0.0
  %411 = vmatpush1.msra.mxu0 0.0
  %412 = vmatprep.subr.mxu0 0.0
  %413 = vmatpush1.msra.mxu0 0.0
  %414 = vmatprep.subr.mxu0 0.0
  %415 = vmatpush1.msra.mxu0 0.0
  %416 = vmatprep.subr.mxu0 0.0
  %417 = vmatpush1.msra.mxu0 0.0
  %418 = vmatprep.subr.mxu0 0.0
  %419 = vmatpush1.msra.mxu0 0.0
  %420 = vmatprep.subr.mxu0 0.0
  %421 = vmatpush1.msra.mxu0 0.0
  %422 = vmatprep.subr.mxu0 0.0
  %423 = vmatpush1.msra.mxu0 0.0
  %424 = vmatprep.subr.mxu0 0.0
  %425 = vmatpush1.msra.mxu0 0.0
  %426 = vmatprep.subr.mxu0 0.0
  %427 = vmatpush1.msra.mxu0 0.0
  %428 = vmatprep.subr.mxu0 0.0
  %429 = vmatpush1.msra.mxu0 0.0
  %430 = vmatprep.subr.mxu0 0.0
  %431 = vmatpush1.msra.mxu0 0.0
  %432 = vmatprep.subr.mxu0 0.0
  %433 = vmatpush1.msra.mxu0 0.0
  %434 = vmatprep.subr.mxu0 0.0
  %435 = vmatpush1.msra.mxu0 0.0
  %436 = vmatprep.subr.mxu0 0.0
  %437 = vmatpush1.msra.mxu0 0.0
  %438 = vmatprep.subr.mxu0 0.0
  %439 = vmatpush1.msra.mxu0 0.0
  %440 = vmatprep.subr.mxu0 0.0
  %441 = vmatpush1.msra.mxu0 0.0
  %442 = vmatprep.subr.mxu0 0.0
  %443 = vmatpush1.msra.mxu0 0.0
  %444 = vmatprep.subr.mxu0 0.0
  %445 = vmatpush1.msra.mxu0 0.0
  %446 = vmatprep.subr.mxu0 0.0
  %447 = vmatpush1.msra.mxu0 0.0
  %448 = vmatprep.subr.mxu0 0.0
  %449 = vmatpush1.msra.mxu0 0.0
  %450 = vmatprep.mubr.f32.mxu0 0.0
  %451 = vmatmul.mubr.f32.gmra.mrb[0].mxu0 %v366
  %v452 = vpop.f32.mrb[0].mxu0
  %v453 = vadd.f32 %v170, %v452
  %v454 = vpop.f32.mrb[0].mxu0
  %v455 = vadd.f32 %v172, %v454
  %456 = vmatprep.mubr.f32.mxu0 0.0
  %457 = vmatmul.mubr.f32.gmra.mrb[0].mxu0 %v369
  %v458 = vpop.f32.mrb[0].mxu0
  %v459 = vadd.f32 %v176, %v458
  %v460 = vpop.f32.mrb[0].mxu0
  %v461 = vadd.f32 %v178, %v460
  %462 = vmatprep.mubr.f32.mxu0 0.0
  %463 = vmatmul.mubr.f32.gmra.mrb[0].mxu0 %v372
  %v464 = vpop.f32.mrb[0].mxu0
  %v465 = vadd.f32 %v182, %v464
  %v466 = vpop.f32.mrb[0].mxu0
  %v467 = vadd.f32 %v184, %v466
  %468 = vmatprep.mubr.f32.mxu0 0.0
  %469 = vmatmul.mubr.f32.gmra.mrb[0].mxu0 %v375
  %v470 = vpop.f32.mrb[0].mxu0
  %v471 = vadd.f32 %v188, %v470
  %v472 = vpop.f32.mrb[0].mxu0
  %v473 = vadd.f32 %v190, %v472
  %474 = vmatprep.mubr.f32.mxu0 0.0
  %475 = vmatmul.mubr.f32.gmra.mrb[0].mxu0 %v378
  %v476 = vpop.f32.mrb[0].mxu0
  %v477 = vadd.f32 %v194, %v476
  %v478 = vpop.f32.mrb[0].mxu0
  %v479 = vadd.f32 %v196, %v478
  %480 = vmatprep.mubr.f32.mxu0 0.0
  %481 = vmatmul.mubr.f32.gmra.mrb[0].mxu0 %v381
  %v482 = vpop.f32.mrb[0].mxu0
  %v483 = vadd.f32 %v200, %v482
  %v484 = vpop.f32.mrb[0].mxu0
  %v485 = vadd.f32 %v202, %v484
  %486 = vmatprep.mubr.f32.mxu0 0.0
  %487 = vmatmul.mubr.f32.gmra.mrb[0].mxu0 %v384
  %v488 = vpop.f32.mrb[0].mxu0
  %v489 = vadd.f32 %v206, %v488
  %v490 = vpop.f32.mrb[0].mxu0
  %v491 = vadd.f32 %v208, %v490
  %492 = vdwg.mxu0
  %493 = vmatprep.subr.mxu0 %v344
  %494 = vmatpush1.msra.mxu0 %v343
  %495 = vmatprep.subr.mxu0 %v348
  %496 = vmatpush1.msra.mxu0 %v347
  %497 = vmatprep.subr.mxu0 %v352
  %498 = vmatpush1.msra.mxu0 %v351
  %499 = vmatprep.subr.mxu0 %v356
  %500 = vmatpush1.msra.mxu0 %v355
  %501 = vmatprep.subr.mxu0 0.0
  %502 = vmatpush1.msra.mxu0 0.0
  %503 = vmatprep.subr.mxu0 0.0
  %504 = vmatpush1.msra.mxu0 0.0
  %505 = vmatprep.subr.mxu0 0.0
  %506 = vmatpush1.msra.mxu0 0.0
  %507 = vmatprep.subr.mxu0 0.0
  %508 = vmatpush1.msra.mxu0 0.0
  %509 = vmatprep.subr.mxu0 0.0
  %510 = vmatpush1.msra.mxu0 0.0
  %511 = vmatprep.subr.mxu0 0.0
  %512 = vmatpush1.msra.mxu0 0.0
  %513 = vmatprep.subr.mxu0 0.0
  %514 = vmatpush1.msra.mxu0 0.0
  %515 = vmatprep.subr.mxu0 0.0
  %516 = vmatpush1.msra.mxu0 0.0
  %517 = vmatprep.subr.mxu0 0.0
  %518 = vmatpush1.msra.mxu0 0.0
  %519 = vmatprep.subr.mxu0 0.0
  %520 = vmatpush1.msra.mxu0 0.0
  %521 = vmatprep.subr.mxu0 0.0
  %522 = vmatpush1.msra.mxu0 0.0
  %523 = vmatprep.subr.mxu0 0.0
  %524 = vmatpush1.msra.mxu0 0.0
  %525 = vmatprep.subr.mxu0 0.0
  %526 = vmatpush1.msra.mxu0 0.0
  %527 = vmatprep.subr.mxu0 0.0
  %528 = vmatpush1.msra.mxu0 0.0
  %529 = vmatprep.subr.mxu0 0.0
  %530 = vmatpush1.msra.mxu0 0.0
  %531 = vmatprep.subr.mxu0 0.0
  %532 = vmatpush1.msra.mxu0 0.0
  %533 = vmatprep.subr.mxu0 0.0
  %534 = vmatpush1.msra.mxu0 0.0
  %535 = vmatprep.subr.mxu0 0.0
  %536 = vmatpush1.msra.mxu0 0.0
  %537 = vmatprep.subr.mxu0 0.0
  %538 = vmatpush1.msra.mxu0 0.0
  %539 = vmatprep.subr.mxu0 0.0
  %540 = vmatpush1.msra.mxu0 0.0
  %541 = vmatprep.subr.mxu0 0.0
  %542 = vmatpush1.msra.mxu0 0.0
  %543 = vmatprep.subr.mxu0 0.0
  %544 = vmatpush1.msra.mxu0 0.0
  %545 = vmatprep.subr.mxu0 0.0
  %546 = vmatpush1.msra.mxu0 0.0
  %547 = vmatprep.subr.mxu0 0.0
  %548 = vmatpush1.msra.mxu0 0.0
  %549 = vmatprep.subr.mxu0 0.0
  %550 = vmatpush1.msra.mxu0 0.0
  %551 = vmatprep.subr.mxu0 0.0
  %552 = vmatpush1.msra.mxu0 0.0
  %553 = vmatprep.subr.mxu0 0.0
  %554 = vmatpush1.msra.mxu0 0.0
  %555 = vmatprep.subr.mxu0 0.0
  %556 = vmatpush1.msra.mxu0 0.0
  %557 = vmatprep.mubr.f32.mxu0 0.0
  %558 = vmatmul.mubr.f32.gmra.mrb[0].mxu0 %v366
  %v559 = vpop.f32.mrb[0].mxu0
  %v560 = vadd.f32 %v301, %v559
  %v561 = vpop.f32.mrb[0].mxu0
  %v562 = vadd.f32 %v303, %v561
  %563 = vmatprep.mubr.f32.mxu0 0.0
  %564 = vmatmul.mubr.f32.gmra.mrb[0].mxu0 %v369
  %v565 = vpop.f32.mrb[0].mxu0
  %v566 = vadd.f32 %v307, %v565
  %v567 = vpop.f32.mrb[0].mxu0
  %v568 = vadd.f32 %v309, %v567
  %569 = vmatprep.mubr.f32.mxu0 0.0
  %570 = vmatmul.mubr.f32.gmra.mrb[0].mxu0 %v372
  %v571 = vpop.f32.mrb[0].mxu0
  %v572 = vadd.f32 %v313, %v571
  %v573 = vpop.f32.mrb[0].mxu0
  %v574 = vadd.f32 %v315, %v573
  %575 = vmatprep.mubr.f32.mxu0 0.0
  %576 = vmatmul.mubr.f32.gmra.mrb[0].mxu0 %v375
  %v577 = vpop.f32.mrb[0].mxu0
  %v578 = vadd.f32 %v319, %v577
  %v579 = vpop.f32.mrb[0].mxu0
  %v580 = vadd.f32 %v321, %v579
  %581 = vmatprep.mubr.f32.mxu0 0.0
  %582 = vmatmul.mubr.f32.gmra.mrb[0].mxu0 %v378
  %v583 = vpop.f32.mrb[0].mxu0
  %v584 = vadd.f32 %v325, %v583
  %v585 = vpop.f32.mrb[0].mxu0
  %v586 = vadd.f32 %v327, %v585
  %587 = vmatprep.mubr.f32.mxu0 0.0
  %588 = vmatmul.mubr.f32.gmra.mrb[0].mxu0 %v381
  %v589 = vpop.f32.mrb[0].mxu0
  %v590 = vadd.f32 %v331, %v589
  %v591 = vpop.f32.mrb[0].mxu0
  %v592 = vadd.f32 %v333, %v591
  %593 = vmatprep.mubr.f32.mxu0 0.0
  %594 = vmatmul.mubr.f32.gmra.mrb[0].mxu0 %v384
  %v595 = vpop.f32.mrb[0].mxu0
  %v596 = vadd.f32 %v337, %v595
  %v597 = vpop.f32.mrb[0].mxu0
  %v598 = vadd.f32 %v339, %v597
  %599 = vdwg.mxu0
  %v600 = vmax.f32 %v453, 0.0
  %v601 = vmax.f32 %v455, 0.0
  %v602 = vmax.f32 %v560, 0.0
  %v603 = vmax.f32 %v562, 0.0
  %v604 = vmax.f32 %v459, 0.0
  %v605 = vmax.f32 %v461, 0.0
  %v606 = vmax.f32 %v566, 0.0
  %v607 = vmax.f32 %v568, 0.0
  %v608 = vmax.f32 %v465, 0.0
  %v609 = vmax.f32 %v467, 0.0
  %v610 = vmax.f32 %v572, 0.0
  %v611 = vmax.f32 %v574, 0.0
  %v612 = vmax.f32 %v471, 0.0
  %v613 = vmax.f32 %v473, 0.0
  %v614 = vmax.f32 %v578, 0.0
  %v615 = vmax.f32 %v580, 0.0
  %v616 = vmax.f32 %v477, 0.0
  %v617 = vmax.f32 %v479, 0.0
  %v618 = vmax.f32 %v584, 0.0
  %v619 = vmax.f32 %v586, 0.0
  %v620 = vmax.f32 %v483, 0.0
  %v621 = vmax.f32 %v485, 0.0
  %v622 = vmax.f32 %v590, 0.0
  %v623 = vmax.f32 %v592, 0.0
  %v624 = vmax.f32 %v489, 0.0
  %v625 = vmax.f32 %v491, 0.0
  %v626 = vmax.f32 %v596, 0.0
  %v627 = vmax.f32 %v598, 0.0
  %v628 = vld [vmem:[%s3] sm:$0xff]
  %v629 = vld [vmem:[%s3 + $0x8] sm:$0xff]
  %v630 = vld [vmem:[%s3 + $0x10] sm:$0xff]
  %vm631 = vcmask 424960
  %v633 = vsel %vm631, %v628, 0
  %v636 = vsel %vm631, %v629, 0
  %v639 = vsel %vm631, %v630, 0
  %vm641 = vcmask 1043456
  %v643 = vsel %vm641, %v624, 0
  %v646 = vsel %vm641, %v625, 0
  %v649 = vsel %vm641, %v626, 0
  %v652 = vsel %vm641, %v627, 0
  %654 = vmatprep.subr.mxu0 %v601
  %655 = vmatpush1.msra.mxu0 %v600
  %656 = vmatprep.subr.mxu0 %v605
  %657 = vmatpush1.msra.mxu0 %v604
  %658 = vmatprep.subr.mxu0 %v609
  %659 = vmatpush1.msra.mxu0 %v608
  %660 = vmatprep.subr.mxu0 %v613
  %661 = vmatpush1.msra.mxu0 %v612
  %662 = vmatprep.subr.mxu0 %v617
  %663 = vmatpush1.msra.mxu0 %v616
  %664 = vmatprep.subr.mxu0 %v621
  %665 = vmatpush1.msra.mxu0 %v620
  %666 = vmatprep.subr.mxu0 %v646
  %667 = vmatpush1.msra.mxu0 %v643
  %668 = vmatprep.subr.mxu0 0.0
  %669 = vmatpush1.msra.mxu0 0.0
  %670 = vmatprep.subr.mxu0 0.0
  %671 = vmatpush1.msra.mxu0 0.0
  %672 = vmatprep.subr.mxu0 0.0
  %673 = vmatpush1.msra.mxu0 0.0
  %674 = vmatprep.subr.mxu0 0.0
  %675 = vmatpush1.msra.mxu0 0.0
  %676 = vmatprep.subr.mxu0 0.0
  %677 = vmatpush1.msra.mxu0 0.0
  %678 = vmatprep.subr.mxu0 0.0
  %679 = vmatpush1.msra.mxu0 0.0
  %680 = vmatprep.subr.mxu0 0.0
  %681 = vmatpush1.msra.mxu0 0.0
  %682 = vmatprep.subr.mxu0 0.0
  %683 = vmatpush1.msra.mxu0 0.0
  %684 = vmatprep.subr.mxu0 0.0
  %685 = vmatpush1.msra.mxu0 0.0
  %686 = vmatprep.subr.mxu0 0.0
  %687 = vmatpush1.msra.mxu0 0.0
  %688 = vmatprep.subr.mxu0 0.0
  %689 = vmatpush1.msra.mxu0 0.0
  %690 = vmatprep.subr.mxu0 0.0
  %691 = vmatpush1.msra.mxu0 0.0
  %692 = vmatprep.subr.mxu0 0.0
  %693 = vmatpush1.msra.mxu0 0.0
  %694 = vmatprep.subr.mxu0 0.0
  %695 = vmatpush1.msra.mxu0 0.0
  %696 = vmatprep.subr.mxu0 0.0
  %697 = vmatpush1.msra.mxu0 0.0
  %698 = vmatprep.subr.mxu0 0.0
  %699 = vmatpush1.msra.mxu0 0.0
  %700 = vmatprep.subr.mxu0 0.0
  %701 = vmatpush1.msra.mxu0 0.0
  %702 = vmatprep.subr.mxu0 0.0
  %703 = vmatpush1.msra.mxu0 0.0
  %704 = vmatprep.subr.mxu0 0.0
  %705 = vmatpush1.msra.mxu0 0.0
  %706 = vmatprep.subr.mxu0 0.0
  %707 = vmatpush1.msra.mxu0 0.0
  %708 = vmatprep.subr.mxu0 0.0
  %709 = vmatpush1.msra.mxu0 0.0
  %710 = vmatprep.subr.mxu0 0.0
  %711 = vmatpush1.msra.mxu0 0.0
  %712 = vmatprep.subr.mxu0 0.0
  %713 = vmatpush1.msra.mxu0 0.0
  %714 = vmatprep.subr.mxu0 0.0
  %715 = vmatpush1.msra.mxu0 0.0
  %716 = vmatprep.subr.mxu0 0.0
  %717 = vmatpush1.msra.mxu0 0.0
  %718 = vmatprep.mubr.f32.mxu0 0.0
  %719 = vmatmul.mubr.f32.gmra.mrb[0].mxu0 %v633
  %v720 = vpop.f32.mrb[0].mxu0
  %v721 = vadd.f32 0.0, %v720
  %v722 = vpop.f32.mrb[0].mxu0
  %v723 = vadd.f32 0.0, %v722
  %724 = vmatprep.mubr.f32.mxu0 0.0
  %725 = vmatmul.mubr.f32.gmra.mrb[0].mxu0 %v636
  %v726 = vpop.f32.mrb[0].mxu0
  %v727 = vadd.f32 0.0, %v726
  %v728 = vpop.f32.mrb[0].mxu0
  %v729 = vadd.f32 0.0, %v728
  %730 = vmatprep.mubr.f32.mxu0 0.0
  %731 = vmatmul.mubr.f32.gmra.mrb[0].mxu0 %v639
  %v732 = vpop.f32.mrb[0].mxu0
  %v733 = vadd.f32 0.0, %v732
  %v734 = vpop.f32.mrb[0].mxu0
  %v735 = vadd.f32 0.0, %v734
  %736 = vdwg.mxu0
  %737 = vmatprep.subr.mxu0 %v603
  %738 = vmatpush1.msra.mxu0 %v602
  %739 = vmatprep.subr.mxu0 %v607
  %740 = vmatpush1.msra.mxu0 %v606
  %741 = vmatprep.subr.mxu0 %v611
  %742 = vmatpush1.msra.mxu0 %v610
  %743 = vmatprep.subr.mxu0 %v615
  %744 = vmatpush1.msra.mxu0 %v614
  %745 = vmatprep.subr.mxu0 %v619
  %746 = vmatpush1.msra.mxu0 %v618
  %747 = vmatprep.subr.mxu0 %v623
  %748 = vmatpush1.msra.mxu0 %v622
  %749 = vmatprep.subr.mxu0 %v652
  %750 = vmatpush1.msra.mxu0 %v649
  %751 = vmatprep.subr.mxu0 0.0
  %752 = vmatpush1.msra.mxu0 0.0
  %753 = vmatprep.subr.mxu0 0.0
  %754 = vmatpush1.msra.mxu0 0.0
  %755 = vmatprep.subr.mxu0 0.0
  %756 = vmatpush1.msra.mxu0 0.0
  %757 = vmatprep.subr.mxu0 0.0
  %758 = vmatpush1.msra.mxu0 0.0
  %759 = vmatprep.subr.mxu0 0.0
  %760 = vmatpush1.msra.mxu0 0.0
  %761 = vmatprep.subr.mxu0 0.0
  %762 = vmatpush1.msra.mxu0 0.0
  %763 = vmatprep.subr.mxu0 0.0
  %764 = vmatpush1.msra.mxu0 0.0
  %765 = vmatprep.subr.mxu0 0.0
  %766 = vmatpush1.msra.mxu0 0.0
  %767 = vmatprep.subr.mxu0 0.0
  %768 = vmatpush1.msra.mxu0 0.0
  %769 = vmatprep.subr.mxu0 0.0
  %770 = vmatpush1.msra.mxu0 0.0
  %771 = vmatprep.subr.mxu0 0.0
  %772 = vmatpush1.msra.mxu0 0.0
  %773 = vmatprep.subr.mxu0 0.0
  %774 = vmatpush1.msra.mxu0 0.0
  %775 = vmatprep.subr.mxu0 0.0
  %776 = vmatpush1.msra.mxu0 0.0
  %777 = vmatprep.subr.mxu0 0.0
  %778 = vmatpush1.msra.mxu0 0.0
  %779 = vmatprep.subr.mxu0 0.0
  %780 = vmatpush1.msra.mxu0 0.0
  %781 = vmatprep.subr.mxu0 0.0
  %782 = vmatpush1.msra.mxu0 0.0
  %783 = vmatprep.subr.mxu0 0.0
  %784 = vmatpush1.msra.mxu0 0.0
  %785 = vmatprep.subr.mxu0 0.0
  %786 = vmatpush1.msra.mxu0 0.0
  %787 = vmatprep.subr.mxu0 0.0
  %788 = vmatpush1.msra.mxu0 0.0
  %789 = vmatprep.subr.mxu0 0.0
  %790 = vmatpush1.msra.mxu0 0.0
  %791 = vmatprep.subr.mxu0 0.0
  %792 = vmatpush1.msra.mxu0 0.0
  %793 = vmatprep.subr.mxu0 0.0
  %794 = vmatpush1.msra.mxu0 0.0
  %795 = vmatprep.subr.mxu0 0.0
  %796 = vmatpush1.msra.mxu0 0.0
  %797 = vmatprep.subr.mxu0 0.0
  %798 = vmatpush1.msra.mxu0 0.0
  %799 = vmatprep.subr.mxu0 0.0
  %800 = vmatpush1.msra.mxu0 0.0
  %801 = vmatprep.mubr.f32.mxu0 0.0
  %802 = vmatmul.mubr.f32.gmra.mrb[0].mxu0 %v633
  %v803 = vpop.f32.mrb[0].mxu0
  %v804 = vadd.f32 0.0, %v803
  %v805 = vpop.f32.mrb[0].mxu0
  %v806 = vadd.f32 0.0, %v805
  %807 = vmatprep.mubr.f32.mxu0 0.0
  %808 = vmatmul.mubr.f32.gmra.mrb[0].mxu0 %v636
  %v809 = vpop.f32.mrb[0].mxu0
  %v810 = vadd.f32 0.0, %v809
  %v811 = vpop.f32.mrb[0].mxu0
  %v812 = vadd.f32 0.0, %v811
  %813 = vmatprep.mubr.f32.mxu0 0.0
  %814 = vmatmul.mubr.f32.gmra.mrb[0].mxu0 %v639
  %v815 = vpop.f32.mrb[0].mxu0
  %v816 = vadd.f32 0.0, %v815
  %v817 = vpop.f32.mrb[0].mxu0
  %v818 = vadd.f32 0.0, %v817
  %819 = vdwg.mxu0
  %v820 = vmax.f32 %v721, 0.0
  %v821 = vmax.f32 %v723, 0.0
  %v822 = vmax.f32 %v804, 0.0
  %v823 = vmax.f32 %v806, 0.0
  %v824 = vand.u32 2147483647, %v721
  %v825 = vand.u32 2147483647, %v723
  %v826 = vand.u32 2147483647, %v804
  %v827 = vand.u32 2147483647, %v806
  %v828 = vsub.f32 0.0, %v824
  %v829 = vsub.f32 0.0, %v825
  %v830 = vsub.f32 0.0, %v826
  %v831 = vsub.f32 0.0, %v827
  %v832 = vmul.f32 %v828, 1.442695
  %v833 = vpow.pop %v832
  %v834 = vmul.f32 %v829, 1.442695
  %v835 = vpow.pop %v834
  %v836 = vmul.f32 %v830, 1.442695
  %v837 = vpow.pop %v836
  %v838 = vmul.f32 %v831, 1.442695
  %v839 = vpow.pop %v838
  %v840 = vadd.f32 %v833, 1.0
  %v841 = vlog2.pop %v840
  %v842 = vmul.f32 %v841, 0.6931472
  %v843 = vmul.f32 -0.5, %v833
  %v844 = vadd.f32 %v843, 1.0
  %v845 = vmul.f32 %v844, %v833
  %v846 = vand.u32 2147483647, %v833
  %vm847 = vcmp.lt.f32.partialorder %v846, 0.0004427343
  %v848 = vsel %vm847, %v845, %v842
  %v849 = vadd.f32 %v835, 1.0
  %v850 = vlog2.pop %v849
  %v851 = vmul.f32 %v850, 0.6931472
  %v852 = vmul.f32 -0.5, %v835
  %v853 = vadd.f32 %v852, 1.0
  %v854 = vmul.f32 %v853, %v835
  %v855 = vand.u32 2147483647, %v835
  %vm856 = vcmp.lt.f32.partialorder %v855, 0.0004427343
  %v857 = vsel %vm856, %v854, %v851
  %v858 = vadd.f32 %v837, 1.0
  %v859 = vlog2.pop %v858
  %v860 = vmul.f32 %v859, 0.6931472
  %v861 = vmul.f32 -0.5, %v837
  %v862 = vadd.f32 %v861, 1.0
  %v863 = vmul.f32 %v862, %v837
  %v864 = vand.u32 2147483647, %v837
  %vm865 = vcmp.lt.f32.partialorder %v864, 0.0004427343
  %v866 = vsel %vm865, %v863, %v860
  %v867 = vadd.f32 %v839, 1.0
  %v868 = vlog2.pop %v867
  %v869 = vmul.f32 %v868, 0.6931472
  %v870 = vmul.f32 -0.5, %v839
  %v871 = vadd.f32 %v870, 1.0
  %v872 = vmul.f32 %v871, %v839
  %v873 = vand.u32 2147483647, %v839
  %vm874 = vcmp.lt.f32.partialorder %v873, 0.0004427343
  %v875 = vsel %vm874, %v872, %v869
  %v876 = vadd.f32 %v820, %v848
  %v877 = vadd.f32 %v821, %v857
  %v878 = vadd.f32 %v822, %v866
  %v879 = vadd.f32 %v823, %v875
  %v880 = vsub.f32 %v727, %v876
  %v881 = vsub.f32 %v729, %v877
  %v882 = vsub.f32 %v810, %v878
  %v883 = vsub.f32 %v812, %v879
  %v884 = vmax.f32 %v733, 0.0
  %v885 = vmax.f32 %v735, 0.0
  %v886 = vmax.f32 %v816, 0.0
  %v887 = vmax.f32 %v818, 0.0
  %v888 = vand.u32 2147483647, %v733
  %v889 = vand.u32 2147483647, %v735
  %v890 = vand.u32 2147483647, %v816
  %v891 = vand.u32 2147483647, %v818
  %v892 = vsub.f32 0.0, %v888
  %v893 = vsub.f32 0.0, %v889
  %v894 = vsub.f32 0.0, %v890
  %v895 = vsub.f32 0.0, %v891
  %v896 = vmul.f32 %v892, 1.442695
  %v897 = vpow.pop %v896
  %v898 = vmul.f32 %v893, 1.442695
  %v899 = vpow.pop %v898
  %v900 = vmul.f32 %v894, 1.442695
  %v901 = vpow.pop %v900
  %v902 = vmul.f32 %v895, 1.442695
  %v903 = vpow.pop %v902
  %v904 = vadd.f32 %v897, 1.0
  %v905 = vlog2.pop %v904
  %v906 = vmul.f32 %v905, 0.6931472
  %v907 = vmul.f32 -0.5, %v897
  %v908 = vadd.f32 %v907, 1.0
  %v909 = vmul.f32 %v908, %v897
  %v910 = vand.u32 2147483647, %v897
  %vm911 = vcmp.lt.f32.partialorder %v910, 0.0004427343
  %v912 = vsel %vm911, %v909, %v906
  %v913 = vadd.f32 %v899, 1.0
  %v914 = vlog2.pop %v913
  %v915 = vmul.f32 %v914, 0.6931472
  %v916 = vmul.f32 -0.5, %v899
  %v917 = vadd.f32 %v916, 1.0
  %v918 = vmul.f32 %v917, %v899
  %v919 = vand.u32 2147483647, %v899
  %vm920 = vcmp.lt.f32.partialorder %v919, 0.0004427343
  %v921 = vsel %vm920, %v918, %v915
  %v922 = vadd.f32 %v901, 1.0
  %v923 = vlog2.pop %v922
  %v924 = vmul.f32 %v923, 0.6931472
  %v925 = vmul.f32 -0.5, %v901
  %v926 = vadd.f32 %v925, 1.0
  %v927 = vmul.f32 %v926, %v901
  %v928 = vand.u32 2147483647, %v901
  %vm929 = vcmp.lt.f32.partialorder %v928, 0.0004427343
  %v930 = vsel %vm929, %v927, %v924
  %v931 = vadd.f32 %v903, 1.0
  %v932 = vlog2.pop %v931
  %v933 = vmul.f32 %v932, 0.6931472
  %v934 = vmul.f32 -0.5, %v903
  %v935 = vadd.f32 %v934, 1.0
  %v936 = vmul.f32 %v935, %v903
  %v937 = vand.u32 2147483647, %v903
  %vm938 = vcmp.lt.f32.partialorder %v937, 0.0004427343
  %v939 = vsel %vm938, %v936, %v933
  %v940 = vadd.f32 %v884, %v912
  %v941 = vadd.f32 %v885, %v921
  %v942 = vadd.f32 %v886, %v930
  %v943 = vadd.f32 %v887, %v939
  %v944 = vadd.f32 %v727, %v940
  %v945 = vadd.f32 %v729, %v941
  %v946 = vadd.f32 %v810, %v942
  %v947 = vadd.f32 %v812, %v943
  %v948 = vmax.f32 %v880, -2.0
  %v949 = vmax.f32 %v881, -2.0
  %v950 = vmax.f32 %v882, -2.0
  %v951 = vmax.f32 %v883, -2.0
  %v952 = vmin.f32 %v948, 2.0
  %v953 = vmin.f32 %v949, 2.0
  %v954 = vmin.f32 %v950, 2.0
  %v955 = vmin.f32 %v951, 2.0
  %v956 = vmax.f32 %v727, -2.0
  %v957 = vmax.f32 %v729, -2.0
  %v958 = vmax.f32 %v810, -2.0
  %v959 = vmax.f32 %v812, -2.0
  %v960 = vmin.f32 %v956, 2.0
  %v961 = vmin.f32 %v957, 2.0
  %v962 = vmin.f32 %v958, 2.0
  %v963 = vmin.f32 %v959, 2.0
  %v964 = vmax.f32 %v944, -2.0
  %v965 = vmax.f32 %v945, -2.0
  %v966 = vmax.f32 %v946, -2.0
  %v967 = vmax.f32 %v947, -2.0
  %v968 = vmin.f32 %v964, 2.0
  %v969 = vmin.f32 %v965, 2.0
  %v970 = vmin.f32 %v966, 2.0
  %v971 = vmin.f32 %v967, 2.0
  %v976 = vrot.slane %v960, 5
  %v977 = vrot.slane %v961, 5
  %v978 = vrot.slane %v962, 5
  %v979 = vrot.slane %v963, 5
  %v988 = vrot.slane %v968, 2
  %v989 = vrot.slane %v969, 2
  %v990 = vrot.slane %v970, 2
  %v991 = vrot.slane %v971, 2
  %vm996 = vcmask 1042432
  %v997 = vsel %vm996, %v952, %v976
  %v998 = vsel %vm996, %v953, %v977
  %v999 = vsel %vm996, %v954, %v978
  %v1000 = vsel %vm996, %v955, %v979
  %vm1001 = vcmask 1045504
  %v1002 = vsel %vm1001, %v997, %v988
  %v1003 = vsel %vm1001, %v998, %v989
  %v1004 = vsel %vm1001, %v999, %v990
  %v1005 = vsel %vm1001, %v1000, %v991
  %1006 = vst [vmem:[%s4] sm:$0xff] %v1002
  %1007 = vst [vmem:[%s4 + $0x8] sm:$0xff] %v1003
  %1008 = vst [vmem:[%s4 + $0x10] sm:$0xff] %v1004
  %1009 = vst [vmem:[%s4 + $0x18] sm:$0xff] %v1005
  %1010 = vst [vmem:[%s4 + $0x20] sm:$0x1] %v988
  %1011 = vst [vmem:[%s4 + $0x28] sm:$0x1] %v989
  %1012 = vst [vmem:[%s4 + $0x30] sm:$0x1] %v990
  %1013 = vst [vmem:[%s4 + $0x38] sm:$0x1] %v991
  // Predicated region
  $region18: #{cerberus_forward.1} parent=0 // pred_check
    _
  $region19: #{cerberus_forward.1} parent=0 // pred_check_branch
    %1015 = sbr.rel (0) target = $region21
  $region20: #{cerberus_forward.1} parent=0 // pred_region
    _
  $region21: #{cerberus_forward.1} parent=0 // pred_fallthru
    _
  // Predicated region
  $region22: #{cerberus_forward.1} parent=0 // pred_check
    _
  $region23: #{cerberus_forward.1} parent=0 // pred_check_branch
    %1017 = sbr.rel (0) target = $region25
  $region24: #{cerberus_forward.1} parent=0 // pred_region
    _
  $region25: #{cerberus_forward.1} parent=0 // pred_fallthru
    _

</llo_original>
